<compile_context>
chip_gen: v7x
topology: tpu7x:2x2x1
jax: 0.10.0
libtpu: 0.0.40
codegen_flags: <defaults>
</compile_context>

<pallas_src>
import jax
import jax.numpy as jnp
from jax.experimental import pallas as pl
from jax.experimental.pallas import tpu as pltpu


# ---------------------------------------------------------------------------
# Kernel body
# ---------------------------------------------------------------------------
def _bicross_kernel(eeg_ref, img_ref, w_vo_ref, w_res_ref, b_ref, out_ref):
    # bf16 MXU operands (no-op if the caller already supplies bf16 activations); f32 accumulate.
    eeg = eeg_ref[...].astype(jnp.bfloat16)          # (bm, De)
    img = img_ref[...].astype(jnp.bfloat16)          # (bm, Di)

    acc = jnp.dot(img, w_vo_ref[...], preferred_element_type=jnp.float32)     # (bm, H)
    acc += jnp.dot(eeg, w_res_ref[...], preferred_element_type=jnp.float32)   # (bm, H)
    out_ref[...] = acc + b_ref[...]                  # broadcast (1, H) fused bias


# ---------------------------------------------------------------------------
# Host-side parameter fusion
# ---------------------------------------------------------------------------
def _pack_params(params):
    """Algebraic fusion (in f32) + bf16 cast of the streamed weight matrices."""
    w_vo = params["wv"] @ params["wo"]                              # (Di, H)
    b_vo = params["bv"] @ params["wo"] + params["bo"]               # (H,)
    w_res = params["wrq"] + params["wre"]                           # (De, H)
    b_res = params["brq"] + params["bre"]                           # (H,)
    bias = (b_vo + b_res).reshape(1, -1).astype(jnp.float32)        # (1, H)
    return w_vo.astype(jnp.bfloat16), w_res.astype(jnp.bfloat16), bias


# ---------------------------------------------------------------------------
# Tiling / VMEM budgeting helpers
# ---------------------------------------------------------------------------
def _round_up(x, m):
    return ((x + m - 1) // m) * m


def _choose_bm(B, H, De, Di, act_bytes, block_m, tile_budget_bytes):
    """Pick the batch-tile size.

    - B <= 8: single full-extent tile (satisfies the (8,128) rule via 'equals full dim').
    - otherwise: at least 2 grid steps (v7x megacore sharding of the 'parallel' axis),
      multiple of 8 (f32 sublane), capped at block_m, shrunk until the double-buffered
      activation + output tiles fit a v7x-safe VMEM budget.
    """
    if B <= 8:
        return B
    bm = min(block_m, max(8, _round_up(pl.cdiv(B, 2), 8)))

    def tiles_bytes(m):
        # double-buffered eeg + img input tiles, double-buffered f32 output tile
        return 2 * m * (De + Di) * act_bytes + 2 * m * H * 4

    while bm > 8 and tiles_bytes(bm) > tile_budget_bytes:
        bm = max(8, _round_up(bm // 2, 8))
    return bm


# ---------------------------------------------------------------------------
# Public wrapper
# ---------------------------------------------------------------------------
def bicross_attention_eeg_only(eeg_feat, img_feat, params, *, heads=4, block_m=512):
    """Pallas TPU implementation of BiCrossAttention_EEGOnly.forward (eval mode).

    `heads` is accepted for API parity but unused: softmax over the single kv token is exactly 1,
    so the attention block reduces to the value projection regardless of the head split.
    """
    del heads
    B, De = eeg_feat.shape
    _, Di = img_feat.shape
    H = params["wo"].shape[1]

    w_vo, w_res, bias = _pack_params(params)

    act_bytes = max(eeg_feat.dtype.itemsize, img_feat.dtype.itemsize)
    # 40 MiB tile budget: safe on v7x (64 MiB/TC physical) with headroom for weights + scratch.
    bm = _choose_bm(B, H, De, Di, act_bytes, block_m, tile_budget_bytes=40 << 20)
    grid = (pl.cdiv(B, bm),)

    # Explicit scoped-VMEM limit: what we actually use + margin (v5e default is only 16 MiB).
    weight_bytes = (Di + De) * H * 2 + H * 4
    tiles_bytes = 2 * bm * (De + Di) * act_bytes + 2 * bm * H * 4
    vmem_limit = int(min(64 << 20, max(16 << 20, tiles_bytes + weight_bytes + (4 << 20))))

    # Advisory cost estimate so XLA overlaps this mem-bound call with neighbours.
    flops = 2 * B * (De + Di) * H
    bytes_accessed = (B * De * eeg_feat.dtype.itemsize
                      + B * Di * img_feat.dtype.itemsize
                      + B * H * 4
                      + weight_bytes)
    cost = pl.CostEstimate(flops=flops, transcendentals=0, bytes_accessed=bytes_accessed)

    def _call(single_buffer_consts):
        if single_buffer_consts:
            const_kw = dict(pipeline_mode=pl.Buffered(1))   # never re-fetched -> 1 buffer
        else:
            const_kw = {}
        in_specs = [
            pl.BlockSpec((bm, De), lambda i: (i, 0)),              # eeg rows (batch-tiled)
            pl.BlockSpec((bm, Di), lambda i: (i, 0)),              # img rows (batch-tiled)
            pl.BlockSpec((Di, H), lambda i: (0, 0), **const_kw),   # fused value->out weight
            pl.BlockSpec((De, H), lambda i: (0, 0), **const_kw),   # fused residual weight
            pl.BlockSpec((1, H), lambda i: (0, 0), **const_kw),    # fused bias row
        ]
        return pl.pallas_call(
            _bicross_kernel,
            out_shape=jax.ShapeDtypeStruct((B, H), jnp.float32),
            grid=grid,
            in_specs=in_specs,
            out_specs=pl.BlockSpec((bm, H), lambda i: (i, 0)),
            compiler_params=pltpu.CompilerParams(
                dimension_semantics=("parallel",),
                vmem_limit_bytes=vmem_limit),
            cost_estimate=cost,
        )(eeg_feat, img_feat, w_vo, w_res, bias)

    try:
        return _call(True)
    except Exception:
        # pl.Buffered(1) on grid-constant operands is an optional VMEM optimization; fall back to
        # default double-buffering if the installed Mosaic backend rejects it.
        return _call(False)


# ---------------------------------------------------------------------------
# Pure-JAX f32 reference (mirrors the PyTorch forward exactly, eval mode)
# ---------------------------------------------------------------------------
def _reference(eeg, img, params, heads=4):
    H = params["wq"].shape[1]
    hd = H // heads
    scale = float(hd) ** (-0.5)
    q = eeg @ params["wq"] + params["bq"]
    k = img @ params["wk"] + params["bk"]
    v = img @ params["wv"] + params["bv"]
    B = eeg.shape[0]
    qh = q.reshape(B, 1, heads, hd).transpose(0, 2, 1, 3)   # (B, heads, 1, hd)
    kh = k.reshape(B, 1, heads, hd).transpose(0, 2, 1, 3)
    vh = v.reshape(B, 1, heads, hd).transpose(0, 2, 1, 3)
    scores = jnp.einsum("bhqd,bhkd->bhqk", qh, kh) * scale  # (B, heads, 1, 1)
    attn = jax.nn.softmax(scores, axis=-1)
    o = jnp.einsum("bhqk,bhkd->bhqd", attn, vh)             # (B, heads, 1, hd)
    o = o.transpose(0, 2, 1, 3).reshape(B, H)
    o = o @ params["wo"] + params["bo"]
    o = o + (eeg @ params["wrq"] + params["brq"])
    o = o + (eeg @ params["wre"] + params["bre"])
    return o


def _init_params(key, dim_eeg, dim_img, hidden_dim):
    """Deterministic synthetic parameters (PyTorch Linear shapes, stored transposed as (in, out))."""
    names_shapes = [
        ("wq", (dim_eeg, hidden_dim)), ("bq", (hidden_dim,)),
        ("wk", (dim_img, hidden_dim)), ("bk", (hidden_dim,)),
        ("wv", (dim_img, hidden_dim)), ("bv", (hidden_dim,)),
        ("wo", (hidden_dim, hidden_dim)), ("bo", (hidden_dim,)),
        ("wrq", (dim_eeg, hidden_dim)), ("brq", (hidden_dim,)),   # CrossAttention.residual_proj
        ("wre", (dim_eeg, hidden_dim)), ("bre", (hidden_dim,)),   # eeg_residual_proj
    ]
    keys = jax.random.split(key, len(names_shapes))
    params = {}
    for (name, shape), k in zip(names_shapes, keys):
        fan_in = shape[0]
        bound = 1.0 / jnp.sqrt(jnp.float32(fan_in))
        params[name] = jax.random.uniform(k, shape, jnp.float32, -bound, bound)
    return params


if __name__ == "__main__":
    # Small shapes consistent with the module (defaults dim_eeg=544, dim_img=4096, hidden=128).
    # B=16 so the batch axis actually tiles (>= 2 grid steps -> exercises the megacore split).
    B, dim_eeg, dim_img, hidden_dim, heads = 16, 64, 256, 128, 4

    key = jax.random.PRNGKey(0)
    k_eeg, k_img, k_par = jax.random.split(key, 3)
    eeg_feat = jax.random.normal(k_eeg, (B, dim_eeg), jnp.float32)
    img_feat = jax.random.normal(k_img, (B, dim_img), jnp.float32)
    params = _init_params(k_par, dim_eeg, dim_img, hidden_dim)

    out = bicross_attention_eeg_only(eeg_feat, img_feat, params, heads=heads)
    out = jax.block_until_ready(out)

    ref = _reference(eeg_feat, img_feat, params, heads=heads)
    assert out.shape == (B, hidden_dim)
    # Tolerance accounts for the bf16 weight/activation cast (accumulation is f32); the structural
    # eliminations (softmax==1, residual fusion, Wv@Wo fold) are exact up to fp reassociation.
    assert jnp.allclose(out, ref, atol=2e-2, rtol=2e-2), "mismatch vs. reference"

    print("KERNEL_OK")
</pallas_src>

<mosaic_0001>
module attributes {stable_mosaic.version = 11 : i64} {
  func.func @_bicross_kernel(%arg0: i32, %arg1: memref<8x64xf32, #tpu.memory_space<vmem>>, %arg2: memref<8x256xf32, #tpu.memory_space<vmem>>, %arg3: memref<256x128xbf16, #tpu.memory_space<vmem>>, %arg4: memref<64x128xbf16, #tpu.memory_space<vmem>>, %arg5: memref<1x128xf32, #tpu.memory_space<vmem>>, %arg6: memref<8x128xf32, #tpu.memory_space<vmem>>) attributes {dimension_semantics = [#tpu.dimension_semantics<parallel>], iteration_bounds = array<i64: 2>, scalar_prefetch = 0 : i64, scratch_operands = 0 : i64, tpu.core_type = #tpu.core_type<tc>, window_params = [{transform_indices = @transform_0, window_bounds = array<i64: 8, 64>}, {transform_indices = @transform_1, window_bounds = array<i64: 8, 256>}, {pipeline_mode = #tpu.pipeline_mode<synchronous>, transform_indices = @transform_2, window_bounds = array<i64: 256, 128>}, {pipeline_mode = #tpu.pipeline_mode<synchronous>, transform_indices = @transform_3, window_bounds = array<i64: 64, 128>}, {pipeline_mode = #tpu.pipeline_mode<synchronous>, transform_indices = @transform_4, window_bounds = array<i64: 1, 128>}, {transform_indices = @transform_5, window_bounds = array<i64: 8, 128>}]} {
    %c0 = arith.constant 0 : index
    %c0_0 = arith.constant 0 : index
    %0 = vector.load %arg1[%c0, %c0_0] : memref<8x64xf32, #tpu.memory_space<vmem>>, vector<8x64xf32>
    %1 = arith.truncf %0 : vector<8x64xf32> to vector<8x64xbf16>
    %c0_1 = arith.constant 0 : index
    %c0_2 = arith.constant 0 : index
    %2 = vector.load %arg2[%c0_1, %c0_2] : memref<8x256xf32, #tpu.memory_space<vmem>>, vector<8x256xf32>
    %3 = arith.truncf %2 : vector<8x256xf32> to vector<8x256xbf16>
    %c0_3 = arith.constant 0 : index
    %c0_4 = arith.constant 0 : index
    %4 = vector.load %arg3[%c0_3, %c0_4] : memref<256x128xbf16, #tpu.memory_space<vmem>>, vector<256x128xbf16>
    %cst = arith.constant dense<0.000000e+00> : vector<8x128xf32>
    %5 = tpu.matmul %3, %4, %cst {dimension_numbers = #tpu.dot_dimension_numbers<[1], [0], [0], [1], [0, 0, 1, 1], [], []>} : vector<8x256xbf16>, vector<256x128xbf16>, vector<8x128xf32> -> vector<8x128xf32>
    %c0_5 = arith.constant 0 : index
    %c0_6 = arith.constant 0 : index
    %6 = vector.load %arg4[%c0_5, %c0_6] : memref<64x128xbf16, #tpu.memory_space<vmem>>, vector<64x128xbf16>
    %cst_7 = arith.constant dense<0.000000e+00> : vector<8x128xf32>
    %7 = tpu.matmul %1, %6, %cst_7 {dimension_numbers = #tpu.dot_dimension_numbers<[1], [0], [0], [1], [0, 0, 1, 1], [], []>} : vector<8x64xbf16>, vector<64x128xbf16>, vector<8x128xf32> -> vector<8x128xf32>
    %8 = arith.addf %5, %7 : vector<8x128xf32>
    %c0_8 = arith.constant 0 : index
    %c0_9 = arith.constant 0 : index
    %9 = vector.load %arg5[%c0_8, %c0_9] : memref<1x128xf32, #tpu.memory_space<vmem>>, vector<1x128xf32>
    %10 = vector.broadcast %9 : vector<1x128xf32> to vector<8x128xf32>
    %11 = arith.addf %8, %10 : vector<8x128xf32>
    %c0_10 = arith.constant 0 : index
    %c0_11 = arith.constant 0 : index
    %12 = vector.load %arg6[%c0_10, %c0_11] : memref<8x128xf32, #tpu.memory_space<vmem>>, vector<8x128xf32>
    tpu.vector_store %arg6[%c0_10, %c0_11], %11 {strides = array<i32>} : memref<8x128xf32, #tpu.memory_space<vmem>>, vector<8x128xf32>,
    return
  }
  func.func @transform_0(%arg0: i32) -> (i32, i32) {
    %c0_i32 = arith.constant 0 : i32
    %c0_i32_0 = arith.constant 0 : i32
    return %arg0, %c0_i32 : i32, i32
  }
  func.func @transform_1(%arg0: i32) -> (i32, i32) {
    %c0_i32 = arith.constant 0 : i32
    %c0_i32_0 = arith.constant 0 : i32
    return %arg0, %c0_i32 : i32, i32
  }
  func.func @transform_2(%arg0: i32) -> (i32, i32) {
    %c0_i32 = arith.constant 0 : i32
    %c0_i32_0 = arith.constant 0 : i32
    %c0_i32_1 = arith.constant 0 : i32
    return %c0_i32, %c0_i32_0 : i32, i32
  }
  func.func @transform_3(%arg0: i32) -> (i32, i32) {
    %c0_i32 = arith.constant 0 : i32
    %c0_i32_0 = arith.constant 0 : i32
    %c0_i32_1 = arith.constant 0 : i32
    return %c0_i32, %c0_i32_0 : i32, i32
  }
  func.func @transform_4(%arg0: i32) -> (i32, i32) {
    %c0_i32 = arith.constant 0 : i32
    %c0_i32_0 = arith.constant 0 : i32
    %c0_i32_1 = arith.constant 0 : i32
    return %c0_i32, %c0_i32_0 : i32, i32
  }
  func.func @transform_5(%arg0: i32) -> (i32, i32) {
    %c0_i32 = arith.constant 0 : i32
    %c0_i32_0 = arith.constant 0 : i32
    return %arg0, %c0_i32 : i32, i32
  }
}

module attributes {stable_mosaic.version = 11 : i64} {
  func.func @_bicross_kernel(%arg0: i32, %arg1: memref<8x64xf32, #tpu.memory_space<vmem>>, %arg2: memref<8x256xf32, #tpu.memory_space<vmem>>, %arg3: memref<256x128xbf16, #tpu.memory_space<vmem>>, %arg4: memref<64x128xbf16, #tpu.memory_space<vmem>>, %arg5: memref<1x128xf32, #tpu.memory_space<vmem>>, %arg6: memref<8x128xf32, #tpu.memory_space<vmem>>) attributes {dimension_semantics = [#tpu.dimension_semantics<parallel>], iteration_bounds = array<i64: 2>, scalar_prefetch = 0 : i64, scratch_operands = 0 : i64, tpu.core_type = #tpu.core_type<tc>, window_params = [{transform_indices = @transform_0, window_bounds = array<i64: 8, 64>}, {transform_indices = @transform_1, window_bounds = array<i64: 8, 256>}, {pipeline_mode = #tpu.pipeline_mode<synchronous>, transform_indices = @transform_2, window_bounds = array<i64: 256, 128>}, {pipeline_mode = #tpu.pipeline_mode<synchronous>, transform_indices = @transform_3, window_bounds = array<i64: 64, 128>}, {pipeline_mode = #tpu.pipeline_mode<synchronous>, transform_indices = @transform_4, window_bounds = array<i64: 1, 128>}, {transform_indices = @transform_5, window_bounds = array<i64: 8, 128>}]} {
    %c0 = arith.constant 0 : index
    %c0_0 = arith.constant 0 : index
    %0 = vector.load %arg1[%c0, %c0_0] : memref<8x64xf32, #tpu.memory_space<vmem>>, vector<8x64xf32>
    %1 = arith.truncf %0 : vector<8x64xf32> to vector<8x64xbf16>
    %c0_1 = arith.constant 0 : index
    %c0_2 = arith.constant 0 : index
    %2 = vector.load %arg2[%c0_1, %c0_2] : memref<8x256xf32, #tpu.memory_space<vmem>>, vector<8x256xf32>
    %3 = arith.truncf %2 : vector<8x256xf32> to vector<8x256xbf16>
    %c0_3 = arith.constant 0 : index
    %c0_4 = arith.constant 0 : index
    %4 = vector.load %arg3[%c0_3, %c0_4] : memref<256x128xbf16, #tpu.memory_space<vmem>>, vector<256x128xbf16>
    %cst = arith.constant dense<0.000000e+00> : vector<8x128xf32>
    %5 = tpu.matmul %3, %4, %cst {dimension_numbers = #tpu.dot_dimension_numbers<[1], [0], [0], [1], [0, 0, 1, 1], [], []>} : vector<8x256xbf16>, vector<256x128xbf16>, vector<8x128xf32> -> vector<8x128xf32>
    %c0_5 = arith.constant 0 : index
    %c0_6 = arith.constant 0 : index
    %6 = vector.load %arg4[%c0_5, %c0_6] : memref<64x128xbf16, #tpu.memory_space<vmem>>, vector<64x128xbf16>
    %cst_7 = arith.constant dense<0.000000e+00> : vector<8x128xf32>
    %7 = tpu.matmul %1, %6, %cst_7 {dimension_numbers = #tpu.dot_dimension_numbers<[1], [0], [0], [1], [0, 0, 1, 1], [], []>} : vector<8x64xbf16>, vector<64x128xbf16>, vector<8x128xf32> -> vector<8x128xf32>
    %8 = arith.addf %5, %7 : vector<8x128xf32>
    %c0_8 = arith.constant 0 : index
    %c0_9 = arith.constant 0 : index
    %9 = vector.load %arg5[%c0_8, %c0_9] : memref<1x128xf32, #tpu.memory_space<vmem>>, vector<1x128xf32>
    %10 = vector.broadcast %9 : vector<1x128xf32> to vector<8x128xf32>
    %11 = arith.addf %8, %10 : vector<8x128xf32>
    %c0_10 = arith.constant 0 : index
    %c0_11 = arith.constant 0 : index
    %12 = vector.load %arg6[%c0_10, %c0_11] : memref<8x128xf32, #tpu.memory_space<vmem>>, vector<8x128xf32>
    tpu.vector_store %arg6[%c0_10, %c0_11], %11 {strides = array<i32>} : memref<8x128xf32, #tpu.memory_space<vmem>>, vector<8x128xf32>,
    return
  }
  func.func @transform_0(%arg0: i32) -> (i32, i32) {
    %c0_i32 = arith.constant 0 : i32
    %c0_i32_0 = arith.constant 0 : i32
    return %arg0, %c0_i32 : i32, i32
  }
  func.func @transform_1(%arg0: i32) -> (i32, i32) {
    %c0_i32 = arith.constant 0 : i32
    %c0_i32_0 = arith.constant 0 : i32
    return %arg0, %c0_i32 : i32, i32
  }
  func.func @transform_2(%arg0: i32) -> (i32, i32) {
    %c0_i32 = arith.constant 0 : i32
    %c0_i32_0 = arith.constant 0 : i32
    %c0_i32_1 = arith.constant 0 : i32
    return %c0_i32, %c0_i32_0 : i32, i32
  }
  func.func @transform_3(%arg0: i32) -> (i32, i32) {
    %c0_i32 = arith.constant 0 : i32
    %c0_i32_0 = arith.constant 0 : i32
    %c0_i32_1 = arith.constant 0 : i32
    return %c0_i32, %c0_i32_0 : i32, i32
  }
  func.func @transform_4(%arg0: i32) -> (i32, i32) {
    %c0_i32 = arith.constant 0 : i32
    %c0_i32_0 = arith.constant 0 : i32
    %c0_i32_1 = arith.constant 0 : i32
    return %c0_i32, %c0_i32_0 : i32, i32
  }
  func.func @transform_5(%arg0: i32) -> (i32, i32) {
    %c0_i32 = arith.constant 0 : i32
    %c0_i32_0 = arith.constant 0 : i32
    return %arg0, %c0_i32 : i32, i32
  }
}

</mosaic_0001>

<llo_original>
// kernel: tpu_custom_call.1
$region0: #{tpu_custom_call.1}
  #allocation0 [shape = 'u32[]', space=smem, size = 0x4, offset = 0x4, fixed_abs, tag = 'smem constant byte address 0x4 - core index']
  #allocation1 [shape = 'u32[144,128]{1,0:T(1,128)}', space=vmem, size = 0x12000, scoped, tag = 'internal scratch']
  %s0 = inlined_call_operand.hbm [shape: f32[16,64], index: 0, kind: input, shape index: {}]
  %s1 = inlined_call_operand.hbm [shape: f32[16,256], index: 1, kind: input, shape index: {}]
  %s2 = inlined_call_operand.hbm [shape: bf16[256,128], index: 2, kind: input, shape index: {}]
  %s3 = inlined_call_operand.hbm [shape: bf16[64,128], index: 3, kind: input, shape index: {}]
  %s4 = inlined_call_operand.vmem [shape: f32[1,128], index: 4, kind: input, shape index: {}]
  %s5 = inlined_call_operand.hbm [shape: f32[16,128], index: 5, kind: output, shape index: {}]
  %s6 = sld [smem:[#allocation0]]
  $region69: #{tpu_custom_call.1} parent=0
    _
  %s8 = ssub.s32 1, %s6
  %s9 = scalar_select 0, %s8, %s6
  $region1: #{tpu_custom_call.1} parent=0
    #allocation2 [shape = 'u8[8192]{0}', space=vmem, size = 0x2000, scoped, tag = 'input window, operand 0']
    #allocation3 [shape = 's32[2]{0}', space=sflag, size = 0x8, scoped, tag = 'scoped memory for tpu_custom_call.1']
    #allocation4 [shape = 's32[2]{0}', space=sflag, size = 0x8, scoped, tag = 'scoped memory for tpu_custom_call.1']
    #allocation5 [shape = 'u8[16384]{0}', space=vmem, size = 0x4000, scoped, tag = 'input window, operand 1']
    #allocation6 [shape = 's32[2]{0}', space=sflag, size = 0x8, scoped, tag = 'scoped memory for tpu_custom_call.1']
    #allocation7 [shape = 'u8[65536]{0}', space=vmem, size = 0x10000, scoped, tag = 'input window, operand 2, single buffered']
    #allocation8 [shape = 'u8[16384]{0}', space=vmem, size = 0x4000, scoped, tag = 'input window, operand 3, single buffered']
    #allocation9 [shape = 's32[1]{0}', space=sflag, size = 0x4, scoped, tag = 'scoped memory for tpu_custom_call.1']
    #allocation10 [shape = 'u8[8192]{0}', space=vmem, size = 0x2000, scoped, tag = 'output window, operand 0']
    %10 = vsyncpa [#allocation3], 0
    %s11 = scalar_lea.sflag [#allocation3], 1
    %12 = vsyncpa %s11, 0
    %13 = vsyncpa [#allocation6], 0
    %s14 = scalar_lea.sflag [#allocation6], 1
    %15 = vsyncpa %s14, 0
    %16 = vsyncpa [#allocation9], 0
    %17 = vsyncpa [#allocation4], 0
    %s18 = scalar_lea.sflag [#allocation4], 1
    %19 = vsyncpa %s18, 0
    loop: start=0, step=1, limit=4
    $region2: #{tpu_custom_call.1} parent=1 // loop_pre_header
      _
    $region3: #{tpu_custom_call.1} parent=1 // loop_header
      %s21 = sphi 0, %s25
      %p22 = scmp.ge.s32.totalorder %s21, 4
      %s31 = sphi 0, %s33
      %s34 = sphi 0, %s31
      %s35 = sphi 0, %s34
      %s51 = sphi 0, %s35
      %s57 = sphi 0, %s59
      %s60 = sphi 0, %s57
      %s61 = sphi 0, %s60
      %s77 = sphi 0, %s61
      %s81 = sphi 0, %s81
      %s83 = sphi 0, %s81
      %s84 = sphi 0, %s83
      %s98 = sphi 0, %s84
      %s102 = sphi 0, %s102
      %s104 = sphi 0, %s102
      %s105 = sphi 0, %s104
      %s119 = sphi 0, %s105
      %s123 = sphi 0, %s123
      %s125 = sphi 0, %s123
      %s126 = sphi 0, %s125
      %s140 = sphi 0, %s126
      %s146 = sphi 0, %s148
      %s149 = sphi 0, %s146
      %s150 = sphi 0, %s149
      %s166 = sphi 0, %s150
    $region4: #{tpu_custom_call.1} parent=1 // loop_header_branch
      %24 = sbr.rel (%p22) target = $region8
    $region5: #{tpu_custom_call.1} parent=1 // loop_body
      %s26 = ssub.s32 %s21, 1
      %s27 = ssub.s32 %s21, 2
      %s28 = sadd.s32 %s21, 1
      %s29 = ssub.s32 %s21, %s28
      %p30 = scmp.eq.s32.totalorder %s29, 0
      %s32 = sadd.s32 %s31, 1
      %s33 = scalar_select %p30, %s31, %s32
      %p36 = pneg %p30
      %p37 = scmp.eq.s32.totalorder %s21, 1
      %p38 = por %p36, %p37
      %p39 = scmp.ne.s32.totalorder %s31, %s34
      %p40 = scmp.eq.s32.totalorder %s21, 0
      %p41 = por %p39, %p40
      %p42 = scmp.ne.s32.totalorder %s31, %s34
      %p43 = scmp.eq.s32.totalorder %s26, 1
      %p44 = por %p42, %p43
      %p45 = scmp.ne.s32.totalorder %s34, %s35
      %p46 = scmp.eq.s32.totalorder %s26, 0
      %p47 = por %p45, %p46
      %p48 = scmp.ne.s32.totalorder %s34, %s35
      %p49 = scmp.eq.s32.totalorder %s27, 1
      %p50 = por %p48, %p49
      %p52 = scmp.ne.s32.totalorder %s35, %s51
      %p53 = scmp.eq.s32.totalorder %s27, 0
      %p54 = por %p52, %p53
      %s55 = ssub.s32 %s21, %s28
      %p56 = scmp.eq.s32.totalorder %s55, 0
      %s58 = sadd.s32 %s57, 1
      %s59 = scalar_select %p56, %s57, %s58
      %p62 = pneg %p56
      %p63 = scmp.eq.s32.totalorder %s21, 1
      %p64 = por %p62, %p63
      %p65 = scmp.ne.s32.totalorder %s57, %s60
      %p66 = scmp.eq.s32.totalorder %s21, 0
      %p67 = por %p65, %p66
      %p68 = scmp.ne.s32.totalorder %s57, %s60
      %p69 = scmp.eq.s32.totalorder %s26, 1
      %p70 = por %p68, %p69
      %p71 = scmp.ne.s32.totalorder %s60, %s61
      %p72 = scmp.eq.s32.totalorder %s26, 0
      %p73 = por %p71, %p72
      %p74 = scmp.ne.s32.totalorder %s60, %s61
      %p75 = scmp.eq.s32.totalorder %s27, 1
      %p76 = por %p74, %p75
      %p78 = scmp.ne.s32.totalorder %s61, %s77
      %p79 = scmp.eq.s32.totalorder %s27, 0
      %p80 = por %p78, %p79
      %s82 = sadd.s32 %s81, 1
      %p85 = scmp.eq.s32.totalorder %s21, 1
      %p86 = scmp.ne.s32.totalorder %s81, %s83
      %p87 = scmp.eq.s32.totalorder %s21, 0
      %p88 = por %p86, %p87
      %p89 = scmp.ne.s32.totalorder %s81, %s83
      %p90 = scmp.eq.s32.totalorder %s26, 1
      %p91 = por %p89, %p90
      %p92 = scmp.ne.s32.totalorder %s83, %s84
      %p93 = scmp.eq.s32.totalorder %s26, 0
      %p94 = por %p92, %p93
      %p95 = scmp.ne.s32.totalorder %s83, %s84
      %p96 = scmp.eq.s32.totalorder %s27, 1
      %p97 = por %p95, %p96
      %p99 = scmp.ne.s32.totalorder %s84, %s98
      %p100 = scmp.eq.s32.totalorder %s27, 0
      %p101 = por %p99, %p100
      %s103 = sadd.s32 %s102, 1
      %p106 = scmp.eq.s32.totalorder %s21, 1
      %p107 = scmp.ne.s32.totalorder %s102, %s104
      %p108 = scmp.eq.s32.totalorder %s21, 0
      %p109 = por %p107, %p108
      %p110 = scmp.ne.s32.totalorder %s102, %s104
      %p111 = scmp.eq.s32.totalorder %s26, 1
      %p112 = por %p110, %p111
      %p113 = scmp.ne.s32.totalorder %s104, %s105
      %p114 = scmp.eq.s32.totalorder %s26, 0
      %p115 = por %p113, %p114
      %p116 = scmp.ne.s32.totalorder %s104, %s105
      %p117 = scmp.eq.s32.totalorder %s27, 1
      %p118 = por %p116, %p117
      %p120 = scmp.ne.s32.totalorder %s105, %s119
      %p121 = scmp.eq.s32.totalorder %s27, 0
      %p122 = por %p120, %p121
      %s124 = sadd.s32 %s123, 1
      %p127 = scmp.eq.s32.totalorder %s21, 1
      %p128 = scmp.ne.s32.totalorder %s123, %s125
      %p129 = scmp.eq.s32.totalorder %s21, 0
      %p130 = por %p128, %p129
      %p131 = scmp.ne.s32.totalorder %s123, %s125
      %p132 = scmp.eq.s32.totalorder %s26, 1
      %p133 = por %p131, %p132
      %p134 = scmp.ne.s32.totalorder %s125, %s126
      %p135 = scmp.eq.s32.totalorder %s26, 0
      %p136 = por %p134, %p135
      %p137 = scmp.ne.s32.totalorder %s125, %s126
      %p138 = scmp.eq.s32.totalorder %s27, 1
      %p139 = por %p137, %p138
      %p141 = scmp.ne.s32.totalorder %s126, %s140
      %p142 = scmp.eq.s32.totalorder %s27, 0
      %p143 = por %p141, %p142
      %s144 = ssub.s32 %s21, %s28
      %p145 = scmp.eq.s32.totalorder %s144, 0
      %s147 = sadd.s32 %s146, 1
      %s148 = scalar_select %p145, %s146, %s147
      %p151 = pneg %p145
      %p152 = scmp.eq.s32.totalorder %s21, 1
      %p153 = por %p151, %p152
      %p154 = scmp.ne.s32.totalorder %s146, %s149
      %p155 = scmp.eq.s32.totalorder %s21, 0
      %p156 = por %p154, %p155
      %p157 = scmp.ne.s32.totalorder %s146, %s149
      %p158 = scmp.eq.s32.totalorder %s26, 1
      %p159 = por %p157, %p158
      %p160 = scmp.ne.s32.totalorder %s149, %s150
      %p161 = scmp.eq.s32.totalorder %s26, 0
      %p162 = por %p160, %p161
      %p163 = scmp.ne.s32.totalorder %s149, %s150
      %p164 = scmp.eq.s32.totalorder %s27, 1
      %p165 = por %p163, %p164
      %p167 = scmp.ne.s32.totalorder %s150, %s166
      %p168 = scmp.eq.s32.totalorder %s27, 0
      %p169 = por %p167, %p168
      %p170 = scmp.le.s32.totalorder 1, %s21
      %p171 = scmp.lt.s32.totalorder %s21, 3
      %p172 = pnand %p170, %p171
      %p173 = pneg %p172
      // Predicated region
      $region9: #{tpu_custom_call.1} parent=5 // pred_check
        _
      $region10: #{tpu_custom_call.1} parent=5 // pred_check_branch
        %175 = sbr.rel (%p172) target = $region12
      $region11: #{tpu_custom_call.1} parent=5 // pred_region
        %s176 = ssub.s32 %s21, 1
        // Predicated region
        $region13: #{tpu_custom_call.1} parent=11 // pred_check
          %p177 = pneg %p94
        $region14: #{tpu_custom_call.1} parent=11 // pred_check_branch
          %179 = sbr.rel (%p177) target = $region16
        $region15: #{tpu_custom_call.1} parent=11 // pred_region
          %s181 = ssub.s32 2048, 2048
          %182 = vsyncadd [#allocation6], %s181
          %s183 = sshll.u32 [#allocation7], 4
          %s184 = int_to_ptr.vmem [resolvable:$true] %s183
          %189 = dma.hbm_to_vmem [thread:$0]  %s2, 2048, %s184, [#allocation6], 64, 64, 4
        $region16: #{tpu_custom_call.1} parent=11 // pred_fallthru
          _
        // Predicated region
        $region17: #{tpu_custom_call.1} parent=11 // pred_check
          %p190 = pneg %p115
        $region18: #{tpu_custom_call.1} parent=11 // pred_check_branch
          %192 = sbr.rel (%p190) target = $region20
        $region19: #{tpu_custom_call.1} parent=11 // pred_region
          %s194 = ssub.s32 512, 512
          %195 = vsyncadd [#allocation9], %s194
          %s196 = sshll.u32 [#allocation8], 4
          %s197 = int_to_ptr.vmem [resolvable:$true] %s196
          %202 = dma.hbm_to_vmem [thread:$0]  %s3, 512, %s197, [#allocation9], 64, 64, 4
        $region20: #{tpu_custom_call.1} parent=11 // pred_fallthru
          _
        // Predicated region
        $region21: #{tpu_custom_call.1} parent=11 // pred_check
          %p203 = pneg %p136
        $region22: #{tpu_custom_call.1} parent=11 // pred_check_branch
          %205 = sbr.rel (%p203) target = $region24
        $region23: #{tpu_custom_call.1} parent=11 // pred_region
          _
        $region24: #{tpu_custom_call.1} parent=11 // pred_fallthru
          _
      $region12: #{tpu_custom_call.1} parent=5 // pred_fallthru
        _
      %p206 = scmp.lt.s32.totalorder %s21, 2
      // Predicated region
      $region25: #{tpu_custom_call.1} parent=5 // pred_check
        %p207 = pneg %p206
      $region26: #{tpu_custom_call.1} parent=5 // pred_check_branch
        %209 = sbr.rel (%p207) target = $region28
      $region27: #{tpu_custom_call.1} parent=5 // pred_region
        // Predicated region
        $region29: #{tpu_custom_call.1} parent=27 // pred_check
          %p210 = pneg %p41
        $region30: #{tpu_custom_call.1} parent=27 // pred_check_branch
          %212 = sbr.rel (%p210) target = $region32
        $region31: #{tpu_custom_call.1} parent=27 // pred_region
          %s213 = sand.u32 %s31, 1
          %s214 = scalar_lea.sflag [#allocation3], %s213
          %s215 = sand.u32 %s31, 1
          %s216 = smul.addr %s215, 8
          %s217 = scalar_lea.vmem [#allocation2], %s216
          %s219 = ssub.s32 128, 128
          %220 = vsyncadd %s214, %s219
          %s221 = smul.addr %s21, 128
          %s222 = scalar_lea.hbm %s0, %s221
          %s224 = sshll.u32 %s217, 4
          %s225 = int_to_ptr.vmem [resolvable:$true] %s224
          %227 = dma.hbm_to_vmem [thread:$0]  %s222, 128, %s225, %s214
        $region32: #{tpu_custom_call.1} parent=27 // pred_fallthru
          _
        // Predicated region
        $region33: #{tpu_custom_call.1} parent=27 // pred_check
          %p228 = pneg %p67
        $region34: #{tpu_custom_call.1} parent=27 // pred_check_branch
          %230 = sbr.rel (%p228) target = $region36
        $region35: #{tpu_custom_call.1} parent=27 // pred_region
          %s231 = sand.u32 %s21, 1
          %s232 = scalar_lea.sflag [#allocation6], %s231
          %s233 = sand.u32 %s57, 1
          %s234 = smul.addr %s233, 16
          %s235 = scalar_lea.vmem [#allocation5], %s234
          %s237 = ssub.s32 256, 256
          %238 = vsyncadd %s232, %s237
          %s239 = smul.addr %s21, 2
          %s240 = smul.addr %s239, 128
          %s241 = scalar_lea.hbm %s1, %s240
          %s243 = sshll.u32 %s235, 4
          %s244 = int_to_ptr.vmem [resolvable:$true] %s243
          %246 = dma.hbm_to_vmem [thread:$0]  %s241, 256, %s244, %s232
        $region36: #{tpu_custom_call.1} parent=27 // pred_fallthru
          _
      $region28: #{tpu_custom_call.1} parent=5 // pred_fallthru
        _
      %p247 = scmp.le.s32.totalorder 1, %s21
      %p248 = scmp.lt.s32.totalorder %s21, 3
      %p249 = pnand %p247, %p248
      %p250 = pneg %p249
      // Predicated region
      $region37: #{tpu_custom_call.1} parent=5 // pred_check
        _
      $region38: #{tpu_custom_call.1} parent=5 // pred_check_branch
        %252 = sbr.rel (%p249) target = $region40
      $region39: #{tpu_custom_call.1} parent=5 // pred_region
        %s253 = ssub.s32 %s21, 1
        %s254 = sand.u32 %s34, 1
        %s255 = scalar_lea.sflag [#allocation3], %s254
        %s256 = sand.u32 %s34, 1
        %s257 = smul.addr %s256, 8
        %s258 = scalar_lea.vmem [#allocation2], %s257
        // Predicated region
        $region41: #{tpu_custom_call.1} parent=39 // pred_check
          %p259 = pneg %p47
        $region42: #{tpu_custom_call.1} parent=39 // pred_check_branch
          %261 = sbr.rel (%p259) target = $region44
        $region43: #{tpu_custom_call.1} parent=39 // pred_region
          %262 = dma.done %s255, 128
        $region44: #{tpu_custom_call.1} parent=39 // pred_fallthru
          _
        %s263 = sand.u32 %s26, 1
        %s264 = scalar_lea.sflag [#allocation6], %s263
        %s265 = sand.u32 %s60, 1
        %s266 = smul.addr %s265, 16
        %s267 = scalar_lea.vmem [#allocation5], %s266
        // Predicated region
        $region45: #{tpu_custom_call.1} parent=39 // pred_check
          %p268 = pneg %p73
        $region46: #{tpu_custom_call.1} parent=39 // pred_check_branch
          %270 = sbr.rel (%p268) target = $region48
        $region47: #{tpu_custom_call.1} parent=39 // pred_region
          %271 = dma.done %s264, 256
        $region48: #{tpu_custom_call.1} parent=39 // pred_fallthru
          _
        // Predicated region
        $region49: #{tpu_custom_call.1} parent=39 // pred_check
          %p272 = pneg %p94
        $region50: #{tpu_custom_call.1} parent=39 // pred_check_branch
          %274 = sbr.rel (%p272) target = $region52
        $region51: #{tpu_custom_call.1} parent=39 // pred_region
          %275 = dma.done [#allocation6], 2048
        $region52: #{tpu_custom_call.1} parent=39 // pred_fallthru
          _
        // Predicated region
        $region53: #{tpu_custom_call.1} parent=39 // pred_check
          %p276 = pneg %p115
        $region54: #{tpu_custom_call.1} parent=39 // pred_check_branch
          %278 = sbr.rel (%p276) target = $region56
        $region55: #{tpu_custom_call.1} parent=39 // pred_region
          %279 = dma.done [#allocation9], 512
        $region56: #{tpu_custom_call.1} parent=39 // pred_fallthru
          _
        %s280 = sand.u32 %s34, 1
        %s281 = scalar_lea.sflag [#allocation3], %s280
        %s282 = sand.u32 %s34, 1
        %s283 = smul.addr %s282, 8
        %s284 = scalar_lea.vmem [#allocation2], %s283
        %p285 = pneg %p47
        %p286 = pneg %p44
        %s287 = sand.u32 %s26, 1
        %s288 = scalar_lea.sflag [#allocation6], %s287
        %s289 = sand.u32 %s60, 1
        %s290 = smul.addr %s289, 16
        %s291 = scalar_lea.vmem [#allocation5], %s290
        %p292 = pneg %p73
        %p293 = pneg %p70
        %p294 = pneg %p94
        %p295 = pneg %p91
        %p296 = pneg %p115
        %p297 = pneg %p112
        %p298 = pneg %p136
        %p299 = pneg %p133
        %p300 = pneg %p162
        %p301 = pneg %p159
        %s302 = sand.u32 %s149, 1
        %s303 = scalar_lea.sflag [#allocation4], %s302
        %s304 = sand.u32 %s149, 1
        %s305 = smul.addr %s304, 8
        %s306 = scalar_lea.vmem [#allocation10], %s305
        %v308 = vld [vmem:[%s258] sm:$0xff]
        %v309 = vpack.c.bf16 %v308, %v308
        %v310 = vld [vmem:[%s267] sm:$0xff]
        %v311 = vld [vmem:[%s267 + $0x8] sm:$0xff]
        %v312 = vpack.c.bf16 %v310, %v310
        %v313 = vpack.c.bf16 %v311, %v311
        %v314 = vld [vmem:[#allocation7] sm:$0xf]
        %v315 = vld [vmem:[#allocation7 + $0x4] sm:$0xf]
        %v316 = vld [vmem:[#allocation7 + $0x8] sm:$0xf]
        %v317 = vld [vmem:[#allocation7 + $0xc] sm:$0xf]
        %v318 = vld [vmem:[#allocation7 + $0x10] sm:$0xf]
        %v319 = vld [vmem:[#allocation7 + $0x14] sm:$0xf]
        %v320 = vld [vmem:[#allocation7 + $0x18] sm:$0xf]
        %v321 = vld [vmem:[#allocation7 + $0x1c] sm:$0xf]
        %v322 = vld [vmem:[#allocation7 + $0x20] sm:$0xf]
        %v323 = vld [vmem:[#allocation7 + $0x24] sm:$0xf]
        %v324 = vld [vmem:[#allocation7 + $0x28] sm:$0xf]
        %v325 = vld [vmem:[#allocation7 + $0x2c] sm:$0xf]
        %v326 = vld [vmem:[#allocation7 + $0x30] sm:$0xf]
        %v327 = vld [vmem:[#allocation7 + $0x34] sm:$0xf]
        %v328 = vld [vmem:[#allocation7 + $0x38] sm:$0xf]
        %v329 = vld [vmem:[#allocation7 + $0x3c] sm:$0xf]
        %v330 = vld [vmem:[#allocation7 + $0x40] sm:$0xf]
        %v331 = vld [vmem:[#allocation7 + $0x44] sm:$0xf]
        %v332 = vld [vmem:[#allocation7 + $0x48] sm:$0xf]
        %v333 = vld [vmem:[#allocation7 + $0x4c] sm:$0xf]
        %v334 = vld [vmem:[#allocation7 + $0x50] sm:$0xf]
        %v335 = vld [vmem:[#allocation7 + $0x54] sm:$0xf]
        %v336 = vld [vmem:[#allocation7 + $0x58] sm:$0xf]
        %v337 = vld [vmem:[#allocation7 + $0x5c] sm:$0xf]
        %v338 = vld [vmem:[#allocation7 + $0x60] sm:$0xf]
        %v339 = vld [vmem:[#allocation7 + $0x64] sm:$0xf]
        %v340 = vld [vmem:[#allocation7 + $0x68] sm:$0xf]
        %v341 = vld [vmem:[#allocation7 + $0x6c] sm:$0xf]
        %v342 = vld [vmem:[#allocation7 + $0x70] sm:$0xf]
        %v343 = vld [vmem:[#allocation7 + $0x74] sm:$0xf]
        %v344 = vld [vmem:[#allocation7 + $0x78] sm:$0xf]
        %v345 = vld [vmem:[#allocation7 + $0x7c] sm:$0xf]
        %v346 = vld [vmem:[#allocation8] sm:$0xf]
        %v347 = vld [vmem:[#allocation8 + $0x4] sm:$0xf]
        %v348 = vld [vmem:[#allocation8 + $0x8] sm:$0xf]
        %v349 = vld [vmem:[#allocation8 + $0xc] sm:$0xf]
        %v350 = vld [vmem:[#allocation8 + $0x10] sm:$0xf]
        %v351 = vld [vmem:[#allocation8 + $0x14] sm:$0xf]
        %v352 = vld [vmem:[#allocation8 + $0x18] sm:$0xf]
        %v353 = vld [vmem:[#allocation8 + $0x1c] sm:$0xf]
        %v362 = vunpack.c.l.b16 %v346
        %v363 = vunpack.c.l.b16 %v347
        %v364 = vunpack.c.l.b16 %v348
        %v365 = vunpack.c.l.b16 %v349
        %v366 = vunpack.c.l.b16 %v350
        %v367 = vunpack.c.l.b16 %v351
        %v368 = vunpack.c.l.b16 %v352
        %v369 = vunpack.c.l.b16 %v353
        %v370 = vpack.c.b16 %v363, %v362
        %v371 = vpack.c.b16 %v365, %v364
        %v372 = vpack.c.b16 %v367, %v366
        %v373 = vpack.c.b16 %v369, %v368
        %vm378 = vcmask 523264
        %v380 = vsel %vm378, %v309, 0
        %382 = vmatprep.subr.bf16.mxu0 0
        %383 = vmatpush1.bf16.msra.mxu0 %v370
        %384 = vmatprep.subr.bf16.mxu0 0
        %385 = vmatpush1.bf16.msra.mxu0 %v371
        %386 = vmatprep.subr.bf16.mxu0 0
        %387 = vmatpush1.bf16.msra.mxu0 %v372
        %388 = vmatprep.subr.bf16.mxu0 0
        %389 = vmatpush1.bf16.msra.mxu0 %v373
        %390 = vmatprep.subr.bf16.mxu0 0
        %391 = vmatpush1.bf16.msra.mxu0 0
        %392 = vmatprep.subr.bf16.mxu0 0
        %393 = vmatpush1.bf16.msra.mxu0 0
        %394 = vmatprep.subr.bf16.mxu0 0
        %395 = vmatpush1.bf16.msra.mxu0 0
        %396 = vmatprep.subr.bf16.mxu0 0
        %397 = vmatpush1.bf16.msra.mxu0 0
        %398 = vmatprep.subr.bf16.mxu0 0
        %399 = vmatpush1.bf16.msra.mxu0 0
        %400 = vmatprep.subr.bf16.mxu0 0
        %401 = vmatpush1.bf16.msra.mxu0 0
        %402 = vmatprep.subr.bf16.mxu0 0
        %403 = vmatpush1.bf16.msra.mxu0 0
        %404 = vmatprep.subr.bf16.mxu0 0
        %405 = vmatpush1.bf16.msra.mxu0 0
        %406 = vmatprep.subr.bf16.mxu0 0
        %407 = vmatpush1.bf16.msra.mxu0 0
        %408 = vmatprep.subr.bf16.mxu0 0
        %409 = vmatpush1.bf16.msra.mxu0 0
        %410 = vmatprep.subr.bf16.mxu0 0
        %411 = vmatpush1.bf16.msra.mxu0 0
        %412 = vmatprep.subr.bf16.mxu0 0
        %413 = vmatpush1.bf16.msra.mxu0 0
        %414 = vmatprep.mubr.bf16.mxu0 0
        %415 = vmatmul.mubr.bf16.gmra.mrb[0].mxu0 %v380
        %v416 = vpop.f32.mrb[0].mxu0
        %v417 = vadd.f32 0.0, %v416
        %v418 = vpop.f32.mrb[0].mxu0
        %v419 = vpop.f32.mrb[0].mxu0
        %v420 = vpop.f32.mrb[0].mxu0
        %421 = vdwg.mxu0
        %v454 = vunpack.c.l.b16 %v314
        %v455 = vunpack.c.l.b16 %v315
        %v456 = vunpack.c.l.b16 %v316
        %v457 = vunpack.c.l.b16 %v317
        %v458 = vunpack.c.l.b16 %v318
        %v459 = vunpack.c.l.b16 %v319
        %v460 = vunpack.c.l.b16 %v320
        %v461 = vunpack.c.l.b16 %v321
        %v462 = vunpack.c.l.b16 %v322
        %v463 = vunpack.c.l.b16 %v323
        %v464 = vunpack.c.l.b16 %v324
        %v465 = vunpack.c.l.b16 %v325
        %v466 = vunpack.c.l.b16 %v326
        %v467 = vunpack.c.l.b16 %v327
        %v468 = vunpack.c.l.b16 %v328
        %v469 = vunpack.c.l.b16 %v329
        %v470 = vunpack.c.l.b16 %v330
        %v471 = vunpack.c.l.b16 %v331
        %v472 = vunpack.c.l.b16 %v332
        %v473 = vunpack.c.l.b16 %v333
        %v474 = vunpack.c.l.b16 %v334
        %v475 = vunpack.c.l.b16 %v335
        %v476 = vunpack.c.l.b16 %v336
        %v477 = vunpack.c.l.b16 %v337
        %v478 = vunpack.c.l.b16 %v338
        %v479 = vunpack.c.l.b16 %v339
        %v480 = vunpack.c.l.b16 %v340
        %v481 = vunpack.c.l.b16 %v341
        %v482 = vunpack.c.l.b16 %v342
        %v483 = vunpack.c.l.b16 %v343
        %v484 = vunpack.c.l.b16 %v344
        %v485 = vunpack.c.l.b16 %v345
        %v486 = vpack.c.b16 %v455, %v454
        %v487 = vpack.c.b16 %v457, %v456
        %v488 = vpack.c.b16 %v459, %v458
        %v489 = vpack.c.b16 %v461, %v460
        %v490 = vpack.c.b16 %v463, %v462
        %v491 = vpack.c.b16 %v465, %v464
        %v492 = vpack.c.b16 %v467, %v466
        %v493 = vpack.c.b16 %v469, %v468
        %v494 = vpack.c.b16 %v471, %v470
        %v495 = vpack.c.b16 %v473, %v472
        %v496 = vpack.c.b16 %v475, %v474
        %v497 = vpack.c.b16 %v477, %v476
        %v498 = vpack.c.b16 %v479, %v478
        %v499 = vpack.c.b16 %v481, %v480
        %v500 = vpack.c.b16 %v483, %v482
        %v501 = vpack.c.b16 %v485, %v484
        %518 = vmatprep.subr.bf16.mxu0 0
        %519 = vmatpush1.bf16.msra.mxu0 %v486
        %520 = vmatprep.subr.bf16.mxu0 0
        %521 = vmatpush1.bf16.msra.mxu0 %v487
        %522 = vmatprep.subr.bf16.mxu0 0
        %523 = vmatpush1.bf16.msra.mxu0 %v488
        %524 = vmatprep.subr.bf16.mxu0 0
        %525 = vmatpush1.bf16.msra.mxu0 %v489
        %526 = vmatprep.subr.bf16.mxu0 0
        %527 = vmatpush1.bf16.msra.mxu0 %v490
        %528 = vmatprep.subr.bf16.mxu0 0
        %529 = vmatpush1.bf16.msra.mxu0 %v491
        %530 = vmatprep.subr.bf16.mxu0 0
        %531 = vmatpush1.bf16.msra.mxu0 %v492
        %532 = vmatprep.subr.bf16.mxu0 0
        %533 = vmatpush1.bf16.msra.mxu0 %v493
        %534 = vmatprep.subr.bf16.mxu0 0
        %535 = vmatpush1.bf16.msra.mxu0 %v494
        %536 = vmatprep.subr.bf16.mxu0 0
        %537 = vmatpush1.bf16.msra.mxu0 %v495
        %538 = vmatprep.subr.bf16.mxu0 0
        %539 = vmatpush1.bf16.msra.mxu0 %v496
        %540 = vmatprep.subr.bf16.mxu0 0
        %541 = vmatpush1.bf16.msra.mxu0 %v497
        %542 = vmatprep.subr.bf16.mxu0 0
        %543 = vmatpush1.bf16.msra.mxu0 %v498
        %544 = vmatprep.subr.bf16.mxu0 0
        %545 = vmatpush1.bf16.msra.mxu0 %v499
        %546 = vmatprep.subr.bf16.mxu0 0
        %547 = vmatpush1.bf16.msra.mxu0 %v500
        %548 = vmatprep.subr.bf16.mxu0 0
        %549 = vmatpush1.bf16.msra.mxu0 %v501
        %550 = vmatprep.mubr.bf16.mxu0 %v313
        %551 = vmatmul.mubr.bf16.gmra.mrb[0].mxu0 %v312
        %v552 = vpop.f32.mrb[0].mxu0
        %v553 = vadd.f32 %v417, %v552
        %v554 = vpop.f32.mrb[0].mxu0
        %v555 = vpop.f32.mrb[0].mxu0
        %v556 = vpop.f32.mrb[0].mxu0
        %557 = vdwg.mxu0
        %v558 = vld [vmem:[%s4] sm:$0x1]
        %v560 = vlaneseq
        %v561 = vshrl.u32 %v560, 7
        %v562 = vsub.s32 0, %v561
        %v563 = vrot.slane %v558, %v562
        %v565 = vadd.f32 %v553, %v563
        %566 = vst [vmem:[%s306] sm:$0xff] %v565
        %s567 = sand.u32 %s149, 1
        %s568 = scalar_lea.sflag [#allocation4], %s567
        %s569 = sand.u32 %s149, 1
        %s570 = smul.addr %s569, 8
        %s571 = scalar_lea.vmem [#allocation10], %s570
        // Predicated region
        $region57: #{tpu_custom_call.1} parent=39 // pred_check
          %p572 = pneg %p159
        $region58: #{tpu_custom_call.1} parent=39 // pred_check_branch
          %574 = sbr.rel (%p572) target = $region60
        $region59: #{tpu_custom_call.1} parent=39 // pred_region
          %s576 = ssub.s32 128, 128
          %577 = vsyncadd %s568, %s576
          %s578 = smul.addr %s26, 128
          %s579 = scalar_lea.hbm %s5, %s578
          %s581 = sshll.u32 %s571, 4
          %s582 = int_to_ptr.vmem [resolvable:$true] %s581
          %584 = dma.vmem_to_hbm [thread:$0]  %s582, 128, %s579, %s568
        $region60: #{tpu_custom_call.1} parent=39 // pred_fallthru
          _
      $region40: #{tpu_custom_call.1} parent=5 // pred_fallthru
        _
      %p585 = scmp.le.s32.totalorder 2, %s21
      // Predicated region
      $region61: #{tpu_custom_call.1} parent=5 // pred_check
        %p586 = pneg %p585
      $region62: #{tpu_custom_call.1} parent=5 // pred_check_branch
        %588 = sbr.rel (%p586) target = $region64
      $region63: #{tpu_custom_call.1} parent=5 // pred_region
        %s589 = ssub.s32 %s21, 2
        // Predicated region
        $region65: #{tpu_custom_call.1} parent=63 // pred_check
          %p590 = pneg %p165
        $region66: #{tpu_custom_call.1} parent=63 // pred_check_branch
          %592 = sbr.rel (%p590) target = $region68
        $region67: #{tpu_custom_call.1} parent=63 // pred_region
          %s593 = sand.u32 %s150, 1
          %s594 = scalar_lea.sflag [#allocation4], %s593
          %s595 = sand.u32 %s150, 1
          %s596 = smul.addr %s595, 8
          %s597 = scalar_lea.vmem [#allocation10], %s596
          %598 = dma.done %s594, 128
        $region68: #{tpu_custom_call.1} parent=63 // pred_fallthru
          _
      $region64: #{tpu_custom_call.1} parent=5 // pred_fallthru
        _
    $region6: #{tpu_custom_call.1} parent=1 // loop_footer
      %s25 = sadd.s32 1, %s21
    $region7: #{tpu_custom_call.1} parent=1 // loop_footer_branch
      %20 = sbr.rel target = $region3
    $region8: #{tpu_custom_call.1} parent=1 // loop_exit
      _
    %599 = vsyncpa [#allocation3], 1
    %s600 = scalar_lea.sflag [#allocation3], 1
    %601 = vsyncpa %s600, 1
    %602 = vsyncpa [#allocation6], 1
    %s603 = scalar_lea.sflag [#allocation6], 1
    %604 = vsyncpa %s603, 1
    %605 = vsyncpa [#allocation9], 1
    %606 = vsyncpa [#allocation4], 1
    %s607 = scalar_lea.sflag [#allocation4], 1
    %608 = vsyncpa %s607, 1

// kernel: tpu_custom_call.1
$region0: #{tpu_custom_call.1}
  #allocation0 [shape = 'u32[]', space=smem, size = 0x4, offset = 0x4, fixed_abs, tag = 'smem constant byte address 0x4 - core index']
  #allocation1 [shape = 'u32[144,128]{1,0:T(1,128)}', space=vmem, size = 0x12000, scoped, tag = 'internal scratch']
  %s0 = inlined_call_operand.hbm [shape: f32[16,64], index: 0, kind: input, shape index: {}]
  %s1 = inlined_call_operand.hbm [shape: f32[16,256], index: 1, kind: input, shape index: {}]
  %s2 = inlined_call_operand.hbm [shape: bf16[256,128], index: 2, kind: input, shape index: {}]
  %s3 = inlined_call_operand.hbm [shape: bf16[64,128], index: 3, kind: input, shape index: {}]
  %s4 = inlined_call_operand.vmem [shape: f32[1,128], index: 4, kind: input, shape index: {}]
  %s5 = inlined_call_operand.hbm [shape: f32[16,128], index: 5, kind: output, shape index: {}]
  %s6 = sld [smem:[#allocation0]]
  $region69: #{tpu_custom_call.1} parent=0
    _
  %s8 = ssub.s32 1, %s6
  %s9 = scalar_select 0, %s8, %s6
  $region1: #{tpu_custom_call.1} parent=0
    #allocation2 [shape = 'u8[8192]{0}', space=vmem, size = 0x2000, scoped, tag = 'input window, operand 0']
    #allocation3 [shape = 's32[2]{0}', space=sflag, size = 0x8, scoped, tag = 'scoped memory for tpu_custom_call.1']
    #allocation4 [shape = 's32[2]{0}', space=sflag, size = 0x8, scoped, tag = 'scoped memory for tpu_custom_call.1']
    #allocation5 [shape = 'u8[16384]{0}', space=vmem, size = 0x4000, scoped, tag = 'input window, operand 1']
    #allocation6 [shape = 's32[2]{0}', space=sflag, size = 0x8, scoped, tag = 'scoped memory for tpu_custom_call.1']
    #allocation7 [shape = 'u8[65536]{0}', space=vmem, size = 0x10000, scoped, tag = 'input window, operand 2, single buffered']
    #allocation8 [shape = 'u8[16384]{0}', space=vmem, size = 0x4000, scoped, tag = 'input window, operand 3, single buffered']
    #allocation9 [shape = 's32[1]{0}', space=sflag, size = 0x4, scoped, tag = 'scoped memory for tpu_custom_call.1']
    #allocation10 [shape = 'u8[8192]{0}', space=vmem, size = 0x2000, scoped, tag = 'output window, operand 0']
    %10 = vsyncpa [#allocation3], 0
    %s11 = scalar_lea.sflag [#allocation3], 1
    %12 = vsyncpa %s11, 0
    %13 = vsyncpa [#allocation6], 0
    %s14 = scalar_lea.sflag [#allocation6], 1
    %15 = vsyncpa %s14, 0
    %16 = vsyncpa [#allocation9], 0
    %17 = vsyncpa [#allocation4], 0
    %s18 = scalar_lea.sflag [#allocation4], 1
    %19 = vsyncpa %s18, 0
    loop: start=0, step=1, limit=4
    $region2: #{tpu_custom_call.1} parent=1 // loop_pre_header
      _
    $region3: #{tpu_custom_call.1} parent=1 // loop_header
      %s21 = sphi 0, %s25
      %p22 = scmp.ge.s32.totalorder %s21, 4
      %s31 = sphi 0, %s33
      %s34 = sphi 0, %s31
      %s35 = sphi 0, %s34
      %s51 = sphi 0, %s35
      %s57 = sphi 0, %s59
      %s60 = sphi 0, %s57
      %s61 = sphi 0, %s60
      %s77 = sphi 0, %s61
      %s81 = sphi 0, %s81
      %s83 = sphi 0, %s81
      %s84 = sphi 0, %s83
      %s98 = sphi 0, %s84
      %s102 = sphi 0, %s102
      %s104 = sphi 0, %s102
      %s105 = sphi 0, %s104
      %s119 = sphi 0, %s105
      %s123 = sphi 0, %s123
      %s125 = sphi 0, %s123
      %s126 = sphi 0, %s125
      %s140 = sphi 0, %s126
      %s146 = sphi 0, %s148
      %s149 = sphi 0, %s146
      %s150 = sphi 0, %s149
      %s166 = sphi 0, %s150
    $region4: #{tpu_custom_call.1} parent=1 // loop_header_branch
      %24 = sbr.rel (%p22) target = $region8
    $region5: #{tpu_custom_call.1} parent=1 // loop_body
      %s26 = ssub.s32 %s21, 1
      %s27 = ssub.s32 %s21, 2
      %s28 = sadd.s32 %s21, 1
      %s29 = ssub.s32 %s21, %s28
      %p30 = scmp.eq.s32.totalorder %s29, 0
      %s32 = sadd.s32 %s31, 1
      %s33 = scalar_select %p30, %s31, %s32
      %p36 = pneg %p30
      %p37 = scmp.eq.s32.totalorder %s21, 1
      %p38 = por %p36, %p37
      %p39 = scmp.ne.s32.totalorder %s31, %s34
      %p40 = scmp.eq.s32.totalorder %s21, 0
      %p41 = por %p39, %p40
      %p42 = scmp.ne.s32.totalorder %s31, %s34
      %p43 = scmp.eq.s32.totalorder %s26, 1
      %p44 = por %p42, %p43
      %p45 = scmp.ne.s32.totalorder %s34, %s35
      %p46 = scmp.eq.s32.totalorder %s26, 0
      %p47 = por %p45, %p46
      %p48 = scmp.ne.s32.totalorder %s34, %s35
      %p49 = scmp.eq.s32.totalorder %s27, 1
      %p50 = por %p48, %p49
      %p52 = scmp.ne.s32.totalorder %s35, %s51
      %p53 = scmp.eq.s32.totalorder %s27, 0
      %p54 = por %p52, %p53
      %s55 = ssub.s32 %s21, %s28
      %p56 = scmp.eq.s32.totalorder %s55, 0
      %s58 = sadd.s32 %s57, 1
      %s59 = scalar_select %p56, %s57, %s58
      %p62 = pneg %p56
      %p63 = scmp.eq.s32.totalorder %s21, 1
      %p64 = por %p62, %p63
      %p65 = scmp.ne.s32.totalorder %s57, %s60
      %p66 = scmp.eq.s32.totalorder %s21, 0
      %p67 = por %p65, %p66
      %p68 = scmp.ne.s32.totalorder %s57, %s60
      %p69 = scmp.eq.s32.totalorder %s26, 1
      %p70 = por %p68, %p69
      %p71 = scmp.ne.s32.totalorder %s60, %s61
      %p72 = scmp.eq.s32.totalorder %s26, 0
      %p73 = por %p71, %p72
      %p74 = scmp.ne.s32.totalorder %s60, %s61
      %p75 = scmp.eq.s32.totalorder %s27, 1
      %p76 = por %p74, %p75
      %p78 = scmp.ne.s32.totalorder %s61, %s77
      %p79 = scmp.eq.s32.totalorder %s27, 0
      %p80 = por %p78, %p79
      %s82 = sadd.s32 %s81, 1
      %p85 = scmp.eq.s32.totalorder %s21, 1
      %p86 = scmp.ne.s32.totalorder %s81, %s83
      %p87 = scmp.eq.s32.totalorder %s21, 0
      %p88 = por %p86, %p87
      %p89 = scmp.ne.s32.totalorder %s81, %s83
      %p90 = scmp.eq.s32.totalorder %s26, 1
      %p91 = por %p89, %p90
      %p92 = scmp.ne.s32.totalorder %s83, %s84
      %p93 = scmp.eq.s32.totalorder %s26, 0
      %p94 = por %p92, %p93
      %p95 = scmp.ne.s32.totalorder %s83, %s84
      %p96 = scmp.eq.s32.totalorder %s27, 1
      %p97 = por %p95, %p96
      %p99 = scmp.ne.s32.totalorder %s84, %s98
      %p100 = scmp.eq.s32.totalorder %s27, 0
      %p101 = por %p99, %p100
      %s103 = sadd.s32 %s102, 1
      %p106 = scmp.eq.s32.totalorder %s21, 1
      %p107 = scmp.ne.s32.totalorder %s102, %s104
      %p108 = scmp.eq.s32.totalorder %s21, 0
      %p109 = por %p107, %p108
      %p110 = scmp.ne.s32.totalorder %s102, %s104
      %p111 = scmp.eq.s32.totalorder %s26, 1
      %p112 = por %p110, %p111
      %p113 = scmp.ne.s32.totalorder %s104, %s105
      %p114 = scmp.eq.s32.totalorder %s26, 0
      %p115 = por %p113, %p114
      %p116 = scmp.ne.s32.totalorder %s104, %s105
      %p117 = scmp.eq.s32.totalorder %s27, 1
      %p118 = por %p116, %p117
      %p120 = scmp.ne.s32.totalorder %s105, %s119
      %p121 = scmp.eq.s32.totalorder %s27, 0
      %p122 = por %p120, %p121
      %s124 = sadd.s32 %s123, 1
      %p127 = scmp.eq.s32.totalorder %s21, 1
      %p128 = scmp.ne.s32.totalorder %s123, %s125
      %p129 = scmp.eq.s32.totalorder %s21, 0
      %p130 = por %p128, %p129
      %p131 = scmp.ne.s32.totalorder %s123, %s125
      %p132 = scmp.eq.s32.totalorder %s26, 1
      %p133 = por %p131, %p132
      %p134 = scmp.ne.s32.totalorder %s125, %s126
      %p135 = scmp.eq.s32.totalorder %s26, 0
      %p136 = por %p134, %p135
      %p137 = scmp.ne.s32.totalorder %s125, %s126
      %p138 = scmp.eq.s32.totalorder %s27, 1
      %p139 = por %p137, %p138
      %p141 = scmp.ne.s32.totalorder %s126, %s140
      %p142 = scmp.eq.s32.totalorder %s27, 0
      %p143 = por %p141, %p142
      %s144 = ssub.s32 %s21, %s28
      %p145 = scmp.eq.s32.totalorder %s144, 0
      %s147 = sadd.s32 %s146, 1
      %s148 = scalar_select %p145, %s146, %s147
      %p151 = pneg %p145
      %p152 = scmp.eq.s32.totalorder %s21, 1
      %p153 = por %p151, %p152
      %p154 = scmp.ne.s32.totalorder %s146, %s149
      %p155 = scmp.eq.s32.totalorder %s21, 0
      %p156 = por %p154, %p155
      %p157 = scmp.ne.s32.totalorder %s146, %s149
      %p158 = scmp.eq.s32.totalorder %s26, 1
      %p159 = por %p157, %p158
      %p160 = scmp.ne.s32.totalorder %s149, %s150
      %p161 = scmp.eq.s32.totalorder %s26, 0
      %p162 = por %p160, %p161
      %p163 = scmp.ne.s32.totalorder %s149, %s150
      %p164 = scmp.eq.s32.totalorder %s27, 1
      %p165 = por %p163, %p164
      %p167 = scmp.ne.s32.totalorder %s150, %s166
      %p168 = scmp.eq.s32.totalorder %s27, 0
      %p169 = por %p167, %p168
      %p170 = scmp.le.s32.totalorder 1, %s21
      %p171 = scmp.lt.s32.totalorder %s21, 3
      %p172 = pnand %p170, %p171
      %p173 = pneg %p172
      // Predicated region
      $region9: #{tpu_custom_call.1} parent=5 // pred_check
        _
      $region10: #{tpu_custom_call.1} parent=5 // pred_check_branch
        %175 = sbr.rel (%p172) target = $region12
      $region11: #{tpu_custom_call.1} parent=5 // pred_region
        %s176 = ssub.s32 %s21, 1
        // Predicated region
        $region13: #{tpu_custom_call.1} parent=11 // pred_check
          %p177 = pneg %p94
        $region14: #{tpu_custom_call.1} parent=11 // pred_check_branch
          %179 = sbr.rel (%p177) target = $region16
        $region15: #{tpu_custom_call.1} parent=11 // pred_region
          %s181 = ssub.s32 2048, 2048
          %182 = vsyncadd [#allocation6], %s181
          %s183 = sshll.u32 [#allocation7], 4
          %s184 = int_to_ptr.vmem [resolvable:$true] %s183
          %189 = dma.hbm_to_vmem [thread:$0]  %s2, 2048, %s184, [#allocation6], 64, 64, 4
        $region16: #{tpu_custom_call.1} parent=11 // pred_fallthru
          _
        // Predicated region
        $region17: #{tpu_custom_call.1} parent=11 // pred_check
          %p190 = pneg %p115
        $region18: #{tpu_custom_call.1} parent=11 // pred_check_branch
          %192 = sbr.rel (%p190) target = $region20
        $region19: #{tpu_custom_call.1} parent=11 // pred_region
          %s194 = ssub.s32 512, 512
          %195 = vsyncadd [#allocation9], %s194
          %s196 = sshll.u32 [#allocation8], 4
          %s197 = int_to_ptr.vmem [resolvable:$true] %s196
          %202 = dma.hbm_to_vmem [thread:$0]  %s3, 512, %s197, [#allocation9], 64, 64, 4
        $region20: #{tpu_custom_call.1} parent=11 // pred_fallthru
          _
        // Predicated region
        $region21: #{tpu_custom_call.1} parent=11 // pred_check
          %p203 = pneg %p136
        $region22: #{tpu_custom_call.1} parent=11 // pred_check_branch
          %205 = sbr.rel (%p203) target = $region24
        $region23: #{tpu_custom_call.1} parent=11 // pred_region
          _
        $region24: #{tpu_custom_call.1} parent=11 // pred_fallthru
          _
      $region12: #{tpu_custom_call.1} parent=5 // pred_fallthru
        _
      %p206 = scmp.lt.s32.totalorder %s21, 2
      // Predicated region
      $region25: #{tpu_custom_call.1} parent=5 // pred_check
        %p207 = pneg %p206
      $region26: #{tpu_custom_call.1} parent=5 // pred_check_branch
        %209 = sbr.rel (%p207) target = $region28
      $region27: #{tpu_custom_call.1} parent=5 // pred_region
        // Predicated region
        $region29: #{tpu_custom_call.1} parent=27 // pred_check
          %p210 = pneg %p41
        $region30: #{tpu_custom_call.1} parent=27 // pred_check_branch
          %212 = sbr.rel (%p210) target = $region32
        $region31: #{tpu_custom_call.1} parent=27 // pred_region
          %s213 = sand.u32 %s31, 1
          %s214 = scalar_lea.sflag [#allocation3], %s213
          %s215 = sand.u32 %s31, 1
          %s216 = smul.addr %s215, 8
          %s217 = scalar_lea.vmem [#allocation2], %s216
          %s219 = ssub.s32 128, 128
          %220 = vsyncadd %s214, %s219
          %s221 = smul.addr %s21, 128
          %s222 = scalar_lea.hbm %s0, %s221
          %s224 = sshll.u32 %s217, 4
          %s225 = int_to_ptr.vmem [resolvable:$true] %s224
          %227 = dma.hbm_to_vmem [thread:$0]  %s222, 128, %s225, %s214
        $region32: #{tpu_custom_call.1} parent=27 // pred_fallthru
          _
        // Predicated region
        $region33: #{tpu_custom_call.1} parent=27 // pred_check
          %p228 = pneg %p67
        $region34: #{tpu_custom_call.1} parent=27 // pred_check_branch
          %230 = sbr.rel (%p228) target = $region36
        $region35: #{tpu_custom_call.1} parent=27 // pred_region
          %s231 = sand.u32 %s21, 1
          %s232 = scalar_lea.sflag [#allocation6], %s231
          %s233 = sand.u32 %s57, 1
          %s234 = smul.addr %s233, 16
          %s235 = scalar_lea.vmem [#allocation5], %s234
          %s237 = ssub.s32 256, 256
          %238 = vsyncadd %s232, %s237
          %s239 = smul.addr %s21, 2
          %s240 = smul.addr %s239, 128
          %s241 = scalar_lea.hbm %s1, %s240
          %s243 = sshll.u32 %s235, 4
          %s244 = int_to_ptr.vmem [resolvable:$true] %s243
          %246 = dma.hbm_to_vmem [thread:$0]  %s241, 256, %s244, %s232
        $region36: #{tpu_custom_call.1} parent=27 // pred_fallthru
          _
      $region28: #{tpu_custom_call.1} parent=5 // pred_fallthru
        _
      %p247 = scmp.le.s32.totalorder 1, %s21
      %p248 = scmp.lt.s32.totalorder %s21, 3
      %p249 = pnand %p247, %p248
      %p250 = pneg %p249
      // Predicated region
      $region37: #{tpu_custom_call.1} parent=5 // pred_check
        _
      $region38: #{tpu_custom_call.1} parent=5 // pred_check_branch
        %252 = sbr.rel (%p249) target = $region40
      $region39: #{tpu_custom_call.1} parent=5 // pred_region
        %s253 = ssub.s32 %s21, 1
        %s254 = sand.u32 %s34, 1
        %s255 = scalar_lea.sflag [#allocation3], %s254
        %s256 = sand.u32 %s34, 1
        %s257 = smul.addr %s256, 8
        %s258 = scalar_lea.vmem [#allocation2], %s257
        // Predicated region
        $region41: #{tpu_custom_call.1} parent=39 // pred_check
          %p259 = pneg %p47
        $region42: #{tpu_custom_call.1} parent=39 // pred_check_branch
          %261 = sbr.rel (%p259) target = $region44
        $region43: #{tpu_custom_call.1} parent=39 // pred_region
          %262 = dma.done %s255, 128
        $region44: #{tpu_custom_call.1} parent=39 // pred_fallthru
          _
        %s263 = sand.u32 %s26, 1
        %s264 = scalar_lea.sflag [#allocation6], %s263
        %s265 = sand.u32 %s60, 1
        %s266 = smul.addr %s265, 16
        %s267 = scalar_lea.vmem [#allocation5], %s266
        // Predicated region
        $region45: #{tpu_custom_call.1} parent=39 // pred_check
          %p268 = pneg %p73
        $region46: #{tpu_custom_call.1} parent=39 // pred_check_branch
          %270 = sbr.rel (%p268) target = $region48
        $region47: #{tpu_custom_call.1} parent=39 // pred_region
          %271 = dma.done %s264, 256
        $region48: #{tpu_custom_call.1} parent=39 // pred_fallthru
          _
        // Predicated region
        $region49: #{tpu_custom_call.1} parent=39 // pred_check
          %p272 = pneg %p94
        $region50: #{tpu_custom_call.1} parent=39 // pred_check_branch
          %274 = sbr.rel (%p272) target = $region52
        $region51: #{tpu_custom_call.1} parent=39 // pred_region
          %275 = dma.done [#allocation6], 2048
        $region52: #{tpu_custom_call.1} parent=39 // pred_fallthru
          _
        // Predicated region
        $region53: #{tpu_custom_call.1} parent=39 // pred_check
          %p276 = pneg %p115
        $region54: #{tpu_custom_call.1} parent=39 // pred_check_branch
          %278 = sbr.rel (%p276) target = $region56
        $region55: #{tpu_custom_call.1} parent=39 // pred_region
          %279 = dma.done [#allocation9], 512
        $region56: #{tpu_custom_call.1} parent=39 // pred_fallthru
          _
        %s280 = sand.u32 %s34, 1
        %s281 = scalar_lea.sflag [#allocation3], %s280
        %s282 = sand.u32 %s34, 1
        %s283 = smul.addr %s282, 8
        %s284 = scalar_lea.vmem [#allocation2], %s283
        %p285 = pneg %p47
        %p286 = pneg %p44
        %s287 = sand.u32 %s26, 1
        %s288 = scalar_lea.sflag [#allocation6], %s287
        %s289 = sand.u32 %s60, 1
        %s290 = smul.addr %s289, 16
        %s291 = scalar_lea.vmem [#allocation5], %s290
        %p292 = pneg %p73
        %p293 = pneg %p70
        %p294 = pneg %p94
        %p295 = pneg %p91
        %p296 = pneg %p115
        %p297 = pneg %p112
        %p298 = pneg %p136
        %p299 = pneg %p133
        %p300 = pneg %p162
        %p301 = pneg %p159
        %s302 = sand.u32 %s149, 1
        %s303 = scalar_lea.sflag [#allocation4], %s302
        %s304 = sand.u32 %s149, 1
        %s305 = smul.addr %s304, 8
        %s306 = scalar_lea.vmem [#allocation10], %s305
        %v308 = vld [vmem:[%s258] sm:$0xff]
        %v309 = vpack.c.bf16 %v308, %v308
        %v310 = vld [vmem:[%s267] sm:$0xff]
        %v311 = vld [vmem:[%s267 + $0x8] sm:$0xff]
        %v312 = vpack.c.bf16 %v310, %v310
        %v313 = vpack.c.bf16 %v311, %v311
        %v314 = vld [vmem:[#allocation7] sm:$0xf]
        %v315 = vld [vmem:[#allocation7 + $0x4] sm:$0xf]
        %v316 = vld [vmem:[#allocation7 + $0x8] sm:$0xf]
        %v317 = vld [vmem:[#allocation7 + $0xc] sm:$0xf]
        %v318 = vld [vmem:[#allocation7 + $0x10] sm:$0xf]
        %v319 = vld [vmem:[#allocation7 + $0x14] sm:$0xf]
        %v320 = vld [vmem:[#allocation7 + $0x18] sm:$0xf]
        %v321 = vld [vmem:[#allocation7 + $0x1c] sm:$0xf]
        %v322 = vld [vmem:[#allocation7 + $0x20] sm:$0xf]
        %v323 = vld [vmem:[#allocation7 + $0x24] sm:$0xf]
        %v324 = vld [vmem:[#allocation7 + $0x28] sm:$0xf]
        %v325 = vld [vmem:[#allocation7 + $0x2c] sm:$0xf]
        %v326 = vld [vmem:[#allocation7 + $0x30] sm:$0xf]
        %v327 = vld [vmem:[#allocation7 + $0x34] sm:$0xf]
        %v328 = vld [vmem:[#allocation7 + $0x38] sm:$0xf]
        %v329 = vld [vmem:[#allocation7 + $0x3c] sm:$0xf]
        %v330 = vld [vmem:[#allocation7 + $0x40] sm:$0xf]
        %v331 = vld [vmem:[#allocation7 + $0x44] sm:$0xf]
        %v332 = vld [vmem:[#allocation7 + $0x48] sm:$0xf]
        %v333 = vld [vmem:[#allocation7 + $0x4c] sm:$0xf]
        %v334 = vld [vmem:[#allocation7 + $0x50] sm:$0xf]
        %v335 = vld [vmem:[#allocation7 + $0x54] sm:$0xf]
        %v336 = vld [vmem:[#allocation7 + $0x58] sm:$0xf]
        %v337 = vld [vmem:[#allocation7 + $0x5c] sm:$0xf]
        %v338 = vld [vmem:[#allocation7 + $0x60] sm:$0xf]
        %v339 = vld [vmem:[#allocation7 + $0x64] sm:$0xf]
        %v340 = vld [vmem:[#allocation7 + $0x68] sm:$0xf]
        %v341 = vld [vmem:[#allocation7 + $0x6c] sm:$0xf]
        %v342 = vld [vmem:[#allocation7 + $0x70] sm:$0xf]
        %v343 = vld [vmem:[#allocation7 + $0x74] sm:$0xf]
        %v344 = vld [vmem:[#allocation7 + $0x78] sm:$0xf]
        %v345 = vld [vmem:[#allocation7 + $0x7c] sm:$0xf]
        %v346 = vld [vmem:[#allocation8] sm:$0xf]
        %v347 = vld [vmem:[#allocation8 + $0x4] sm:$0xf]
        %v348 = vld [vmem:[#allocation8 + $0x8] sm:$0xf]
        %v349 = vld [vmem:[#allocation8 + $0xc] sm:$0xf]
        %v350 = vld [vmem:[#allocation8 + $0x10] sm:$0xf]
        %v351 = vld [vmem:[#allocation8 + $0x14] sm:$0xf]
        %v352 = vld [vmem:[#allocation8 + $0x18] sm:$0xf]
        %v353 = vld [vmem:[#allocation8 + $0x1c] sm:$0xf]
        %v362 = vunpack.c.l.b16 %v346
        %v363 = vunpack.c.l.b16 %v347
        %v364 = vunpack.c.l.b16 %v348
        %v365 = vunpack.c.l.b16 %v349
        %v366 = vunpack.c.l.b16 %v350
        %v367 = vunpack.c.l.b16 %v351
        %v368 = vunpack.c.l.b16 %v352
        %v369 = vunpack.c.l.b16 %v353
        %v370 = vpack.c.b16 %v363, %v362
        %v371 = vpack.c.b16 %v365, %v364
        %v372 = vpack.c.b16 %v367, %v366
        %v373 = vpack.c.b16 %v369, %v368
        %vm378 = vcmask 523264
        %v380 = vsel %vm378, %v309, 0
        %382 = vmatprep.subr.bf16.mxu0 0
        %383 = vmatpush1.bf16.msra.mxu0 %v370
        %384 = vmatprep.subr.bf16.mxu0 0
        %385 = vmatpush1.bf16.msra.mxu0 %v371
        %386 = vmatprep.subr.bf16.mxu0 0
        %387 = vmatpush1.bf16.msra.mxu0 %v372
        %388 = vmatprep.subr.bf16.mxu0 0
        %389 = vmatpush1.bf16.msra.mxu0 %v373
        %390 = vmatprep.subr.bf16.mxu0 0
        %391 = vmatpush1.bf16.msra.mxu0 0
        %392 = vmatprep.subr.bf16.mxu0 0
        %393 = vmatpush1.bf16.msra.mxu0 0
        %394 = vmatprep.subr.bf16.mxu0 0
        %395 = vmatpush1.bf16.msra.mxu0 0
        %396 = vmatprep.subr.bf16.mxu0 0
        %397 = vmatpush1.bf16.msra.mxu0 0
        %398 = vmatprep.subr.bf16.mxu0 0
        %399 = vmatpush1.bf16.msra.mxu0 0
        %400 = vmatprep.subr.bf16.mxu0 0
        %401 = vmatpush1.bf16.msra.mxu0 0
        %402 = vmatprep.subr.bf16.mxu0 0
        %403 = vmatpush1.bf16.msra.mxu0 0
        %404 = vmatprep.subr.bf16.mxu0 0
        %405 = vmatpush1.bf16.msra.mxu0 0
        %406 = vmatprep.subr.bf16.mxu0 0
        %407 = vmatpush1.bf16.msra.mxu0 0
        %408 = vmatprep.subr.bf16.mxu0 0
        %409 = vmatpush1.bf16.msra.mxu0 0
        %410 = vmatprep.subr.bf16.mxu0 0
        %411 = vmatpush1.bf16.msra.mxu0 0
        %412 = vmatprep.subr.bf16.mxu0 0
        %413 = vmatpush1.bf16.msra.mxu0 0
        %414 = vmatprep.mubr.bf16.mxu0 0
        %415 = vmatmul.mubr.bf16.gmra.mrb[0].mxu0 %v380
        %v416 = vpop.f32.mrb[0].mxu0
        %v417 = vadd.f32 0.0, %v416
        %v418 = vpop.f32.mrb[0].mxu0
        %v419 = vpop.f32.mrb[0].mxu0
        %v420 = vpop.f32.mrb[0].mxu0
        %421 = vdwg.mxu0
        %v454 = vunpack.c.l.b16 %v314
        %v455 = vunpack.c.l.b16 %v315
        %v456 = vunpack.c.l.b16 %v316
        %v457 = vunpack.c.l.b16 %v317
        %v458 = vunpack.c.l.b16 %v318
        %v459 = vunpack.c.l.b16 %v319
        %v460 = vunpack.c.l.b16 %v320
        %v461 = vunpack.c.l.b16 %v321
        %v462 = vunpack.c.l.b16 %v322
        %v463 = vunpack.c.l.b16 %v323
        %v464 = vunpack.c.l.b16 %v324
        %v465 = vunpack.c.l.b16 %v325
        %v466 = vunpack.c.l.b16 %v326
        %v467 = vunpack.c.l.b16 %v327
        %v468 = vunpack.c.l.b16 %v328
        %v469 = vunpack.c.l.b16 %v329
        %v470 = vunpack.c.l.b16 %v330
        %v471 = vunpack.c.l.b16 %v331
        %v472 = vunpack.c.l.b16 %v332
        %v473 = vunpack.c.l.b16 %v333
        %v474 = vunpack.c.l.b16 %v334
        %v475 = vunpack.c.l.b16 %v335
        %v476 = vunpack.c.l.b16 %v336
        %v477 = vunpack.c.l.b16 %v337
        %v478 = vunpack.c.l.b16 %v338
        %v479 = vunpack.c.l.b16 %v339
        %v480 = vunpack.c.l.b16 %v340
        %v481 = vunpack.c.l.b16 %v341
        %v482 = vunpack.c.l.b16 %v342
        %v483 = vunpack.c.l.b16 %v343
        %v484 = vunpack.c.l.b16 %v344
        %v485 = vunpack.c.l.b16 %v345
        %v486 = vpack.c.b16 %v455, %v454
        %v487 = vpack.c.b16 %v457, %v456
        %v488 = vpack.c.b16 %v459, %v458
        %v489 = vpack.c.b16 %v461, %v460
        %v490 = vpack.c.b16 %v463, %v462
        %v491 = vpack.c.b16 %v465, %v464
        %v492 = vpack.c.b16 %v467, %v466
        %v493 = vpack.c.b16 %v469, %v468
        %v494 = vpack.c.b16 %v471, %v470
        %v495 = vpack.c.b16 %v473, %v472
        %v496 = vpack.c.b16 %v475, %v474
        %v497 = vpack.c.b16 %v477, %v476
        %v498 = vpack.c.b16 %v479, %v478
        %v499 = vpack.c.b16 %v481, %v480
        %v500 = vpack.c.b16 %v483, %v482
        %v501 = vpack.c.b16 %v485, %v484
        %518 = vmatprep.subr.bf16.mxu0 0
        %519 = vmatpush1.bf16.msra.mxu0 %v486
        %520 = vmatprep.subr.bf16.mxu0 0
        %521 = vmatpush1.bf16.msra.mxu0 %v487
        %522 = vmatprep.subr.bf16.mxu0 0
        %523 = vmatpush1.bf16.msra.mxu0 %v488
        %524 = vmatprep.subr.bf16.mxu0 0
        %525 = vmatpush1.bf16.msra.mxu0 %v489
        %526 = vmatprep.subr.bf16.mxu0 0
        %527 = vmatpush1.bf16.msra.mxu0 %v490
        %528 = vmatprep.subr.bf16.mxu0 0
        %529 = vmatpush1.bf16.msra.mxu0 %v491
        %530 = vmatprep.subr.bf16.mxu0 0
        %531 = vmatpush1.bf16.msra.mxu0 %v492
        %532 = vmatprep.subr.bf16.mxu0 0
        %533 = vmatpush1.bf16.msra.mxu0 %v493
        %534 = vmatprep.subr.bf16.mxu0 0
        %535 = vmatpush1.bf16.msra.mxu0 %v494
        %536 = vmatprep.subr.bf16.mxu0 0
        %537 = vmatpush1.bf16.msra.mxu0 %v495
        %538 = vmatprep.subr.bf16.mxu0 0
        %539 = vmatpush1.bf16.msra.mxu0 %v496
        %540 = vmatprep.subr.bf16.mxu0 0
        %541 = vmatpush1.bf16.msra.mxu0 %v497
        %542 = vmatprep.subr.bf16.mxu0 0
        %543 = vmatpush1.bf16.msra.mxu0 %v498
        %544 = vmatprep.subr.bf16.mxu0 0
        %545 = vmatpush1.bf16.msra.mxu0 %v499
        %546 = vmatprep.subr.bf16.mxu0 0
        %547 = vmatpush1.bf16.msra.mxu0 %v500
        %548 = vmatprep.subr.bf16.mxu0 0
        %549 = vmatpush1.bf16.msra.mxu0 %v501
        %550 = vmatprep.mubr.bf16.mxu0 %v313
        %551 = vmatmul.mubr.bf16.gmra.mrb[0].mxu0 %v312
        %v552 = vpop.f32.mrb[0].mxu0
        %v553 = vadd.f32 %v417, %v552
        %v554 = vpop.f32.mrb[0].mxu0
        %v555 = vpop.f32.mrb[0].mxu0
        %v556 = vpop.f32.mrb[0].mxu0
        %557 = vdwg.mxu0
        %v558 = vld [vmem:[%s4] sm:$0x1]
        %v560 = vlaneseq
        %v561 = vshrl.u32 %v560, 7
        %v562 = vsub.s32 0, %v561
        %v563 = vrot.slane %v558, %v562
        %v565 = vadd.f32 %v553, %v563
        %566 = vst [vmem:[%s306] sm:$0xff] %v565
        %s567 = sand.u32 %s149, 1
        %s568 = scalar_lea.sflag [#allocation4], %s567
        %s569 = sand.u32 %s149, 1
        %s570 = smul.addr %s569, 8
        %s571 = scalar_lea.vmem [#allocation10], %s570
        // Predicated region
        $region57: #{tpu_custom_call.1} parent=39 // pred_check
          %p572 = pneg %p159
        $region58: #{tpu_custom_call.1} parent=39 // pred_check_branch
          %574 = sbr.rel (%p572) target = $region60
        $region59: #{tpu_custom_call.1} parent=39 // pred_region
          %s576 = ssub.s32 128, 128
          %577 = vsyncadd %s568, %s576
          %s578 = smul.addr %s26, 128
          %s579 = scalar_lea.hbm %s5, %s578
          %s581 = sshll.u32 %s571, 4
          %s582 = int_to_ptr.vmem [resolvable:$true] %s581
          %584 = dma.vmem_to_hbm [thread:$0]  %s582, 128, %s579, %s568
        $region60: #{tpu_custom_call.1} parent=39 // pred_fallthru
          _
      $region40: #{tpu_custom_call.1} parent=5 // pred_fallthru
        _
      %p585 = scmp.le.s32.totalorder 2, %s21
      // Predicated region
      $region61: #{tpu_custom_call.1} parent=5 // pred_check
        %p586 = pneg %p585
      $region62: #{tpu_custom_call.1} parent=5 // pred_check_branch
        %588 = sbr.rel (%p586) target = $region64
      $region63: #{tpu_custom_call.1} parent=5 // pred_region
        %s589 = ssub.s32 %s21, 2
        // Predicated region
        $region65: #{tpu_custom_call.1} parent=63 // pred_check
          %p590 = pneg %p165
        $region66: #{tpu_custom_call.1} parent=63 // pred_check_branch
          %592 = sbr.rel (%p590) target = $region68
        $region67: #{tpu_custom_call.1} parent=63 // pred_region
          %s593 = sand.u32 %s150, 1
          %s594 = scalar_lea.sflag [#allocation4], %s593
          %s595 = sand.u32 %s150, 1
          %s596 = smul.addr %s595, 8
          %s597 = scalar_lea.vmem [#allocation10], %s596
          %598 = dma.done %s594, 128
        $region68: #{tpu_custom_call.1} parent=63 // pred_fallthru
          _
      $region64: #{tpu_custom_call.1} parent=5 // pred_fallthru
        _
    $region6: #{tpu_custom_call.1} parent=1 // loop_footer
      %s25 = sadd.s32 1, %s21
    $region7: #{tpu_custom_call.1} parent=1 // loop_footer_branch
      %20 = sbr.rel target = $region3
    $region8: #{tpu_custom_call.1} parent=1 // loop_exit
      _
    %599 = vsyncpa [#allocation3], 1
    %s600 = scalar_lea.sflag [#allocation3], 1
    %601 = vsyncpa %s600, 1
    %602 = vsyncpa [#allocation6], 1
    %s603 = scalar_lea.sflag [#allocation6], 1
    %604 = vsyncpa %s603, 1
    %605 = vsyncpa [#allocation9], 1
    %606 = vsyncpa [#allocation4], 1
    %s607 = scalar_lea.sflag [#allocation4], 1
    %608 = vsyncpa %s607, 1

</llo_original>
